<compile_context>
chip_gen: v7x
topology: tpu7x:2x2x1
jax: 0.10.0
libtpu: 0.0.40
codegen_flags: <defaults>
</compile_context>

<pallas_src>
import functools

import jax
import jax.numpy as jnp
from jax import lax
from jax.experimental import pallas as pl
from jax.experimental.pallas import tpu as pltpu


def _round_up(x, m):
    return ((x + m - 1) // m) * m


def policy_net_kernel(s_ref, w1_ref, b1_ref, w2_ref, b2_ref, w3_ref, b3_ref,
                      o_ref):
    # s_ref: (tb, state_dim) -- native PyTorch layout, streamed from HBM.
    # fc1 + ReLU: contract w1 (32, state_dim) with s (tb, state_dim) over
    # state_dim -> h1 (32, tb); the batch now rides the 128-wide lane axis.
    h1 = lax.dot_general(
        w1_ref[...], s_ref[...],
        dimension_numbers=(((1,), (1,)), ((), ())),
        preferred_element_type=jnp.float32) + b1_ref[...]
    h1 = jnp.maximum(h1, 0.0)
    # fc2 + ReLU : (64, 32) @ (32, tb) -> (64, tb)
    h2 = jnp.dot(w2_ref[...], h1,
                 preferred_element_type=jnp.float32) + b2_ref[...]
    h2 = jnp.maximum(h2, 0.0)
    # fc3 : (action_dim, 64) @ (64, tb) -> (action_dim, tb)
    logits = jnp.dot(w3_ref[...], h2,
                     preferred_element_type=jnp.float32) + b3_ref[...]
    # Numerically stable softmax over the action (sublane) axis.  Each batch
    # column is independent, so garbage in clipped overhang columns of the
    # last tile (if batch % tb != 0) can never reach valid outputs.
    m = jnp.max(logits, axis=0, keepdims=True)
    e = jnp.exp(logits - m)
    denom = jnp.sum(e, axis=0, keepdims=True)
    o_ref[...] = (e / denom).astype(o_ref.dtype)


@functools.partial(jax.jit, static_argnames=("block_batch",))
def policy_net_forward(s, params, *, block_batch=4096):
    w1, b1, w2, b2, w3, b3 = params
    batch, state_dim = s.shape
    action_dim = w3.shape[0]

    # Batch tile: multiple of 128 (lane-dense output stores), large enough to
    # amortize per-grid-step overhead, clamped so the VMEM footprint stays
    # inside the 32 MiB limit requested below.  Also capped at ceil(batch/2)
    # (rounded to 128) so large batches always yield >= 2 grid steps for the
    # "parallel" axis (v7x megacore sharding).
    block_batch = max(128, min(_round_up(block_batch, 128), 16384))
    tb = min(block_batch, _round_up(pl.cdiv(batch, 2), 128))
    grid = (pl.cdiv(batch, tb),)   # ragged last block handled by clipping

    n_params = (w1.size + b1.size + w2.size + b2.size + w3.size + b3.size)
    cost = pl.CostEstimate(
        flops=2 * batch * (state_dim * 32 + 32 * 64 + 64 * action_dim),
        transcendentals=batch * action_dim,
        bytes_accessed=4 * (batch * (state_dim + action_dim) + n_params),
    )

    def const_spec(shape):
        # Same block every grid step -> stays VMEM-resident (no re-DMA).
        return pl.BlockSpec(shape, lambda i: (0, 0))

    out_t = pl.pallas_call(
        policy_net_kernel,
        out_shape=jax.ShapeDtypeStruct((action_dim, batch), jnp.float32),
        grid=grid,
        in_specs=[
            pl.BlockSpec((tb, state_dim), lambda i: (i, 0)),  # streamed states
            const_spec(w1.shape), const_spec(b1.shape),
            const_spec(w2.shape), const_spec(b2.shape),
            const_spec(w3.shape), const_spec(b3.shape),
        ],
        out_specs=pl.BlockSpec((action_dim, tb), lambda i: (0, i)),
        compiler_params=pltpu.CompilerParams(
            dimension_semantics=("parallel",),   # shard batch over TCs on v7x
            vmem_limit_bytes=32 * 1024 * 1024,
        ),
        cost_estimate=cost,
    )(s, w1, b1, w2, b2, w3, b3)

    return out_t.T                               # (batch, action_dim)


def init_params(key, state_dim, action_dim):
    """Deterministic init mimicking nn.Linear's U(-1/sqrt(fan_in), 1/sqrt(fan_in)).

    Weights use PyTorch's native (out_features, in_features) layout; biases are
    (out_features, 1) columns so they broadcast over the lane (batch) axis.
    """
    dims = [(state_dim, 32), (32, 64), (64, action_dim)]
    params = []
    for fan_in, fan_out in dims:
        key, kw, kb = jax.random.split(key, 3)
        bound = 1.0 / jnp.sqrt(jnp.float32(fan_in))
        w = jax.random.uniform(kw, (fan_out, fan_in), jnp.float32,
                               minval=-bound, maxval=bound)
        b = jax.random.uniform(kb, (fan_out, 1), jnp.float32,
                               minval=-bound, maxval=bound)
        params.extend([w, b])
    return tuple(params)


def reference_forward(s, params):
    w1, b1, w2, b2, w3, b3 = params
    h1 = jax.nn.relu(s @ w1.T + b1.T)
    h2 = jax.nn.relu(h1 @ w2.T + b2.T)
    logits = h2 @ w3.T + b3.T
    return jax.nn.softmax(logits, axis=-1)


# TODO(synk): the Adam optimizer (self.opt) and reward() REINFORCE objective
# are training-time utilities, not part of forward(); not implemented here.

if __name__ == "__main__":
    key = jax.random.PRNGKey(0)
    state_dim, action_dim = 8, 4

    kp, kx = jax.random.split(key)
    params = init_params(kp, state_dim, action_dim)

    # Main case: batch large enough to give the "parallel" grid axis 2 steps.
    s = jax.random.normal(kx, (512, state_dim), jnp.float32)
    out = jax.block_until_ready(policy_net_forward(s, params))
    ref = reference_forward(s, params)
    assert out.shape == (512, action_dim)
    assert jnp.allclose(out, ref, atol=1e-5, rtol=1e-5)
    assert jnp.allclose(jnp.sum(out, axis=-1), 1.0, atol=1e-5)

    # Ragged batches (not multiples of the 128-lane tile) exercise the
    # grid-clipping overhang path that replaced the explicit jnp.pad.
    for n, seed in ((8, 1), (300, 2)):
        s_r = jax.random.normal(jax.random.PRNGKey(seed), (n, state_dim),
                                jnp.float32)
        out_r = jax.block_until_ready(policy_net_forward(s_r, params))
        assert out_r.shape == (n, action_dim)
        assert jnp.allclose(out_r, reference_forward(s_r, params),
                            atol=1e-5, rtol=1e-5)

    print("KERNEL_OK")
</pallas_src>

<mosaic_0001>
module attributes {stable_mosaic.version = 11 : i64} {
  func.func @policy_net_kernel(%arg0: i32, %arg1: memref<256x8xf32, #tpu.memory_space<vmem>>, %arg2: memref<32x8xf32, #tpu.memory_space<vmem>>, %arg3: memref<32x1xf32, #tpu.memory_space<vmem>>, %arg4: memref<64x32xf32, #tpu.memory_space<vmem>>, %arg5: memref<64x1xf32, #tpu.memory_space<vmem>>, %arg6: memref<4x64xf32, #tpu.memory_space<vmem>>, %arg7: memref<4x1xf32, #tpu.memory_space<vmem>>, %arg8: memref<4x256xf32, #tpu.memory_space<vmem>>) attributes {dimension_semantics = [#tpu.dimension_semantics<parallel>], iteration_bounds = array<i64: 2>, scalar_prefetch = 0 : i64, scratch_operands = 0 : i64, tpu.core_type = #tpu.core_type<tc>, window_params = [{transform_indices = @transform_0, window_bounds = array<i64: 256, 8>}, {pipeline_mode = #tpu.pipeline_mode<synchronous>, transform_indices = @transform_1, window_bounds = array<i64: 32, 8>}, {pipeline_mode = #tpu.pipeline_mode<synchronous>, transform_indices = @transform_2, window_bounds = array<i64: 32, 1>}, {pipeline_mode = #tpu.pipeline_mode<synchronous>, transform_indices = @transform_3, window_bounds = array<i64: 64, 32>}, {pipeline_mode = #tpu.pipeline_mode<synchronous>, transform_indices = @transform_4, window_bounds = array<i64: 64, 1>}, {pipeline_mode = #tpu.pipeline_mode<synchronous>, transform_indices = @transform_5, window_bounds = array<i64: 4, 64>}, {pipeline_mode = #tpu.pipeline_mode<synchronous>, transform_indices = @transform_6, window_bounds = array<i64: 4, 1>}, {transform_indices = @transform_7, window_bounds = array<i64: 4, 256>}]} {
    %c0 = arith.constant 0 : index
    %c0_0 = arith.constant 0 : index
    %0 = vector.load %arg2[%c0, %c0_0] : memref<32x8xf32, #tpu.memory_space<vmem>>, vector<32x8xf32>
    %c0_1 = arith.constant 0 : index
    %c0_2 = arith.constant 0 : index
    %1 = vector.load %arg1[%c0_1, %c0_2] : memref<256x8xf32, #tpu.memory_space<vmem>>, vector<256x8xf32>
    %cst = arith.constant dense<0.000000e+00> : vector<32x256xf32>
    %2 = tpu.matmul %0, %1, %cst {dimension_numbers = #tpu.dot_dimension_numbers<[1], [1], [0], [0], [0, 0, 1, 0], [], []>} : vector<32x8xf32>, vector<256x8xf32>, vector<32x256xf32> -> vector<32x256xf32>
    %c0_3 = arith.constant 0 : index
    %c0_4 = arith.constant 0 : index
    %3 = vector.load %arg3[%c0_3, %c0_4] : memref<32x1xf32, #tpu.memory_space<vmem>>, vector<32x1xf32>
    %4 = vector.broadcast %3 : vector<32x1xf32> to vector<32x256xf32>
    %5 = arith.addf %2, %4 : vector<32x256xf32>
    %cst_5 = arith.constant 0.000000e+00 : f32
    %6 = vector.broadcast %cst_5 : f32 to vector<32x256xf32>
    %7 = arith.maximumf %5, %6 : vector<32x256xf32>
    %c0_6 = arith.constant 0 : index
    %c0_7 = arith.constant 0 : index
    %8 = vector.load %arg4[%c0_6, %c0_7] : memref<64x32xf32, #tpu.memory_space<vmem>>, vector<64x32xf32>
    %cst_8 = arith.constant dense<0.000000e+00> : vector<64x256xf32>
    %9 = tpu.matmul %8, %7, %cst_8 {dimension_numbers = #tpu.dot_dimension_numbers<[1], [0], [0], [1], [0, 0, 1, 1], [], []>} : vector<64x32xf32>, vector<32x256xf32>, vector<64x256xf32> -> vector<64x256xf32>
    %c0_9 = arith.constant 0 : index
    %c0_10 = arith.constant 0 : index
    %10 = vector.load %arg5[%c0_9, %c0_10] : memref<64x1xf32, #tpu.memory_space<vmem>>, vector<64x1xf32>
    %11 = vector.broadcast %10 : vector<64x1xf32> to vector<64x256xf32>
    %12 = arith.addf %9, %11 : vector<64x256xf32>
    %cst_11 = arith.constant 0.000000e+00 : f32
    %13 = vector.broadcast %cst_11 : f32 to vector<64x256xf32>
    %14 = arith.maximumf %12, %13 : vector<64x256xf32>
    %c0_12 = arith.constant 0 : index
    %c0_13 = arith.constant 0 : index
    %15 = vector.load %arg6[%c0_12, %c0_13] : memref<4x64xf32, #tpu.memory_space<vmem>>, vector<4x64xf32>
    %cst_14 = arith.constant dense<0.000000e+00> : vector<4x256xf32>
    %16 = tpu.matmul %15, %14, %cst_14 {dimension_numbers = #tpu.dot_dimension_numbers<[1], [0], [0], [1], [0, 0, 1, 1], [], []>} : vector<4x64xf32>, vector<64x256xf32>, vector<4x256xf32> -> vector<4x256xf32>
    %c0_15 = arith.constant 0 : index
    %c0_16 = arith.constant 0 : index
    %17 = vector.load %arg7[%c0_15, %c0_16] : memref<4x1xf32, #tpu.memory_space<vmem>>, vector<4x1xf32>
    %18 = vector.broadcast %17 : vector<4x1xf32> to vector<4x256xf32>
    %19 = arith.addf %16, %18 : vector<4x256xf32>
    %cst_17 = arith.constant dense<0xFF800000> : vector<256xf32>
    %20 = vector.multi_reduction <maximumf>, %19, %cst_17 [0] : vector<4x256xf32> to vector<256xf32>
    %21 = vector.shape_cast %20 : vector<256xf32> to vector<1x256xf32>
    %22 = vector.broadcast %21 : vector<1x256xf32> to vector<4x256xf32>
    %23 = arith.subf %19, %22 : vector<4x256xf32>
    %24 = math.exp %23 : vector<4x256xf32>
    %cst_18 = arith.constant dense<0.000000e+00> : vector<256xf32>
    %25 = vector.multi_reduction <add>, %24, %cst_18 [0] : vector<4x256xf32> to vector<256xf32>
    %26 = vector.shape_cast %25 : vector<256xf32> to vector<1x256xf32>
    %27 = vector.broadcast %26 : vector<1x256xf32> to vector<4x256xf32>
    %28 = arith.divf %24, %27 : vector<4x256xf32>
    %c0_19 = arith.constant 0 : index
    %c0_20 = arith.constant 0 : index
    %29 = vector.load %arg8[%c0_19, %c0_20] : memref<4x256xf32, #tpu.memory_space<vmem>>, vector<4x256xf32>
    tpu.vector_store %arg8[%c0_19, %c0_20], %28 {strides = array<i32>} : memref<4x256xf32, #tpu.memory_space<vmem>>, vector<4x256xf32>,
    return
  }
  func.func @transform_0(%arg0: i32) -> (i32, i32) {
    %c0_i32 = arith.constant 0 : i32
    %c0_i32_0 = arith.constant 0 : i32
    return %arg0, %c0_i32 : i32, i32
  }
  func.func @transform_1(%arg0: i32) -> (i32, i32) {
    %c0_i32 = arith.constant 0 : i32
    %c0_i32_0 = arith.constant 0 : i32
    %c0_i32_1 = arith.constant 0 : i32
    return %c0_i32, %c0_i32_0 : i32, i32
  }
  func.func @transform_2(%arg0: i32) -> (i32, i32) {
    %c0_i32 = arith.constant 0 : i32
    %c0_i32_0 = arith.constant 0 : i32
    %c0_i32_1 = arith.constant 0 : i32
    return %c0_i32, %c0_i32_0 : i32, i32
  }
  func.func @transform_3(%arg0: i32) -> (i32, i32) {
    %c0_i32 = arith.constant 0 : i32
    %c0_i32_0 = arith.constant 0 : i32
    %c0_i32_1 = arith.constant 0 : i32
    return %c0_i32, %c0_i32_0 : i32, i32
  }
  func.func @transform_4(%arg0: i32) -> (i32, i32) {
    %c0_i32 = arith.constant 0 : i32
    %c0_i32_0 = arith.constant 0 : i32
    %c0_i32_1 = arith.constant 0 : i32
    return %c0_i32, %c0_i32_0 : i32, i32
  }
  func.func @transform_5(%arg0: i32) -> (i32, i32) {
    %c0_i32 = arith.constant 0 : i32
    %c0_i32_0 = arith.constant 0 : i32
    %c0_i32_1 = arith.constant 0 : i32
    return %c0_i32, %c0_i32_0 : i32, i32
  }
  func.func @transform_6(%arg0: i32) -> (i32, i32) {
    %c0_i32 = arith.constant 0 : i32
    %c0_i32_0 = arith.constant 0 : i32
    %c0_i32_1 = arith.constant 0 : i32
    return %c0_i32, %c0_i32_0 : i32, i32
  }
  func.func @transform_7(%arg0: i32) -> (i32, i32) {
    %c0_i32 = arith.constant 0 : i32
    %c0_i32_0 = arith.constant 0 : i32
    return %c0_i32, %arg0 : i32, i32
  }
}

</mosaic_0001>

<llo_original>
// kernel: policy_net_forward.1
$region0: #{policy_net_forward.1}
  #allocation0 [shape = 'u32[]', space=smem, size = 0x4, offset = 0x4, fixed_abs, tag = 'smem constant byte address 0x4 - core index']
  #allocation1 [shape = 'u32[144,128]{1,0:T(1,128)}', space=vmem, size = 0x12000, scoped, tag = 'internal scratch']
  %s0 = inlined_call_operand.vmem [shape: f32[512,8], index: 0, kind: input, shape index: {}]
  %s1 = inlined_call_operand.vmem [shape: f32[32,8], index: 1, kind: input, shape index: {}]
  %s2 = inlined_call_operand.vmem [shape: f32[32,1], index: 2, kind: input, shape index: {}]
  %s3 = inlined_call_operand.vmem [shape: f32[64,32], index: 3, kind: input, shape index: {}]
  %s4 = inlined_call_operand.vmem [shape: f32[64,1], index: 4, kind: input, shape index: {}]
  %s5 = inlined_call_operand.vmem [shape: f32[4,64], index: 5, kind: input, shape index: {}]
  %s6 = inlined_call_operand.vmem [shape: f32[4,1], index: 6, kind: input, shape index: {}]
  %s7 = inlined_call_operand.hbm [shape: f32[4,512], index: 7, kind: output, shape index: {}]
  %s8 = sld [smem:[#allocation0]]
  $region61: #{policy_net_forward.1} parent=0
    _
  %s10 = ssub.s32 1, %s8
  %s11 = scalar_select 0, %s10, %s8
  $region1: #{policy_net_forward.1} parent=0
    #allocation2 [shape = 'u8[8192]{0}', space=vmem, size = 0x2000, scoped, tag = 'output window, operand 0']
    #allocation3 [shape = 's32[2]{0}', space=sflag, size = 0x8, scoped, tag = 'scoped memory for policy_net_forward.1']
    %12 = vsyncpa [#allocation3], 0
    %s13 = scalar_lea.sflag [#allocation3], 1
    %14 = vsyncpa %s13, 0
    loop: start=0, step=1, limit=4
    $region2: #{policy_net_forward.1} parent=1 // loop_pre_header
      _
    $region3: #{policy_net_forward.1} parent=1 // loop_header
      %s16 = sphi 0, %s20
      %p17 = scmp.ge.s32.totalorder %s16, 4
      %s26 = sphi 0, %s28
      %s29 = sphi 0, %s26
      %s30 = sphi 0, %s29
      %s46 = sphi 0, %s30
      %s50 = sphi 0, %s50
      %s52 = sphi 0, %s50
      %s53 = sphi 0, %s52
      %s67 = sphi 0, %s53
      %s71 = sphi 0, %s71
      %s73 = sphi 0, %s71
      %s74 = sphi 0, %s73
      %s88 = sphi 0, %s74
      %s92 = sphi 0, %s92
      %s94 = sphi 0, %s92
      %s95 = sphi 0, %s94
      %s109 = sphi 0, %s95
      %s113 = sphi 0, %s113
      %s115 = sphi 0, %s113
      %s116 = sphi 0, %s115
      %s130 = sphi 0, %s116
      %s134 = sphi 0, %s134
      %s136 = sphi 0, %s134
      %s137 = sphi 0, %s136
      %s151 = sphi 0, %s137
      %s155 = sphi 0, %s155
      %s157 = sphi 0, %s155
      %s158 = sphi 0, %s157
      %s172 = sphi 0, %s158
      %s178 = sphi 0, %s180
      %s181 = sphi 0, %s178
      %s182 = sphi 0, %s181
      %s198 = sphi 0, %s182
    $region4: #{policy_net_forward.1} parent=1 // loop_header_branch
      %19 = sbr.rel (%p17) target = $region8
    $region5: #{policy_net_forward.1} parent=1 // loop_body
      %s21 = ssub.s32 %s16, 1
      %s22 = ssub.s32 %s16, 2
      %s23 = sadd.s32 %s16, 1
      %s24 = ssub.s32 %s16, %s23
      %p25 = scmp.eq.s32.totalorder %s24, 0
      %s27 = sadd.s32 %s26, 1
      %s28 = scalar_select %p25, %s26, %s27
      %p31 = pneg %p25
      %p32 = scmp.eq.s32.totalorder %s16, 1
      %p33 = por %p31, %p32
      %p34 = scmp.ne.s32.totalorder %s26, %s29
      %p35 = scmp.eq.s32.totalorder %s16, 0
      %p36 = por %p34, %p35
      %p37 = scmp.ne.s32.totalorder %s26, %s29
      %p38 = scmp.eq.s32.totalorder %s21, 1
      %p39 = por %p37, %p38
      %p40 = scmp.ne.s32.totalorder %s29, %s30
      %p41 = scmp.eq.s32.totalorder %s21, 0
      %p42 = por %p40, %p41
      %p43 = scmp.ne.s32.totalorder %s29, %s30
      %p44 = scmp.eq.s32.totalorder %s22, 1
      %p45 = por %p43, %p44
      %p47 = scmp.ne.s32.totalorder %s30, %s46
      %p48 = scmp.eq.s32.totalorder %s22, 0
      %p49 = por %p47, %p48
      %s51 = sadd.s32 %s50, 1
      %p54 = scmp.eq.s32.totalorder %s16, 1
      %p55 = scmp.ne.s32.totalorder %s50, %s52
      %p56 = scmp.eq.s32.totalorder %s16, 0
      %p57 = por %p55, %p56
      %p58 = scmp.ne.s32.totalorder %s50, %s52
      %p59 = scmp.eq.s32.totalorder %s21, 1
      %p60 = por %p58, %p59
      %p61 = scmp.ne.s32.totalorder %s52, %s53
      %p62 = scmp.eq.s32.totalorder %s21, 0
      %p63 = por %p61, %p62
      %p64 = scmp.ne.s32.totalorder %s52, %s53
      %p65 = scmp.eq.s32.totalorder %s22, 1
      %p66 = por %p64, %p65
      %p68 = scmp.ne.s32.totalorder %s53, %s67
      %p69 = scmp.eq.s32.totalorder %s22, 0
      %p70 = por %p68, %p69
      %s72 = sadd.s32 %s71, 1
      %p75 = scmp.eq.s32.totalorder %s16, 1
      %p76 = scmp.ne.s32.totalorder %s71, %s73
      %p77 = scmp.eq.s32.totalorder %s16, 0
      %p78 = por %p76, %p77
      %p79 = scmp.ne.s32.totalorder %s71, %s73
      %p80 = scmp.eq.s32.totalorder %s21, 1
      %p81 = por %p79, %p80
      %p82 = scmp.ne.s32.totalorder %s73, %s74
      %p83 = scmp.eq.s32.totalorder %s21, 0
      %p84 = por %p82, %p83
      %p85 = scmp.ne.s32.totalorder %s73, %s74
      %p86 = scmp.eq.s32.totalorder %s22, 1
      %p87 = por %p85, %p86
      %p89 = scmp.ne.s32.totalorder %s74, %s88
      %p90 = scmp.eq.s32.totalorder %s22, 0
      %p91 = por %p89, %p90
      %s93 = sadd.s32 %s92, 1
      %p96 = scmp.eq.s32.totalorder %s16, 1
      %p97 = scmp.ne.s32.totalorder %s92, %s94
      %p98 = scmp.eq.s32.totalorder %s16, 0
      %p99 = por %p97, %p98
      %p100 = scmp.ne.s32.totalorder %s92, %s94
      %p101 = scmp.eq.s32.totalorder %s21, 1
      %p102 = por %p100, %p101
      %p103 = scmp.ne.s32.totalorder %s94, %s95
      %p104 = scmp.eq.s32.totalorder %s21, 0
      %p105 = por %p103, %p104
      %p106 = scmp.ne.s32.totalorder %s94, %s95
      %p107 = scmp.eq.s32.totalorder %s22, 1
      %p108 = por %p106, %p107
      %p110 = scmp.ne.s32.totalorder %s95, %s109
      %p111 = scmp.eq.s32.totalorder %s22, 0
      %p112 = por %p110, %p111
      %s114 = sadd.s32 %s113, 1
      %p117 = scmp.eq.s32.totalorder %s16, 1
      %p118 = scmp.ne.s32.totalorder %s113, %s115
      %p119 = scmp.eq.s32.totalorder %s16, 0
      %p120 = por %p118, %p119
      %p121 = scmp.ne.s32.totalorder %s113, %s115
      %p122 = scmp.eq.s32.totalorder %s21, 1
      %p123 = por %p121, %p122
      %p124 = scmp.ne.s32.totalorder %s115, %s116
      %p125 = scmp.eq.s32.totalorder %s21, 0
      %p126 = por %p124, %p125
      %p127 = scmp.ne.s32.totalorder %s115, %s116
      %p128 = scmp.eq.s32.totalorder %s22, 1
      %p129 = por %p127, %p128
      %p131 = scmp.ne.s32.totalorder %s116, %s130
      %p132 = scmp.eq.s32.totalorder %s22, 0
      %p133 = por %p131, %p132
      %s135 = sadd.s32 %s134, 1
      %p138 = scmp.eq.s32.totalorder %s16, 1
      %p139 = scmp.ne.s32.totalorder %s134, %s136
      %p140 = scmp.eq.s32.totalorder %s16, 0
      %p141 = por %p139, %p140
      %p142 = scmp.ne.s32.totalorder %s134, %s136
      %p143 = scmp.eq.s32.totalorder %s21, 1
      %p144 = por %p142, %p143
      %p145 = scmp.ne.s32.totalorder %s136, %s137
      %p146 = scmp.eq.s32.totalorder %s21, 0
      %p147 = por %p145, %p146
      %p148 = scmp.ne.s32.totalorder %s136, %s137
      %p149 = scmp.eq.s32.totalorder %s22, 1
      %p150 = por %p148, %p149
      %p152 = scmp.ne.s32.totalorder %s137, %s151
      %p153 = scmp.eq.s32.totalorder %s22, 0
      %p154 = por %p152, %p153
      %s156 = sadd.s32 %s155, 1
      %p159 = scmp.eq.s32.totalorder %s16, 1
      %p160 = scmp.ne.s32.totalorder %s155, %s157
      %p161 = scmp.eq.s32.totalorder %s16, 0
      %p162 = por %p160, %p161
      %p163 = scmp.ne.s32.totalorder %s155, %s157
      %p164 = scmp.eq.s32.totalorder %s21, 1
      %p165 = por %p163, %p164
      %p166 = scmp.ne.s32.totalorder %s157, %s158
      %p167 = scmp.eq.s32.totalorder %s21, 0
      %p168 = por %p166, %p167
      %p169 = scmp.ne.s32.totalorder %s157, %s158
      %p170 = scmp.eq.s32.totalorder %s22, 1
      %p171 = por %p169, %p170
      %p173 = scmp.ne.s32.totalorder %s158, %s172
      %p174 = scmp.eq.s32.totalorder %s22, 0
      %p175 = por %p173, %p174
      %s176 = ssub.s32 %s16, %s23
      %p177 = scmp.eq.s32.totalorder %s176, 0
      %s179 = sadd.s32 %s178, 1
      %s180 = scalar_select %p177, %s178, %s179
      %p183 = pneg %p177
      %p184 = scmp.eq.s32.totalorder %s16, 1
      %p185 = por %p183, %p184
      %p186 = scmp.ne.s32.totalorder %s178, %s181
      %p187 = scmp.eq.s32.totalorder %s16, 0
      %p188 = por %p186, %p187
      %p189 = scmp.ne.s32.totalorder %s178, %s181
      %p190 = scmp.eq.s32.totalorder %s21, 1
      %p191 = por %p189, %p190
      %p192 = scmp.ne.s32.totalorder %s181, %s182
      %p193 = scmp.eq.s32.totalorder %s21, 0
      %p194 = por %p192, %p193
      %p195 = scmp.ne.s32.totalorder %s181, %s182
      %p196 = scmp.eq.s32.totalorder %s22, 1
      %p197 = por %p195, %p196
      %p199 = scmp.ne.s32.totalorder %s182, %s198
      %p200 = scmp.eq.s32.totalorder %s22, 0
      %p201 = por %p199, %p200
      %p202 = scmp.le.s32.totalorder 1, %s16
      %p203 = scmp.lt.s32.totalorder %s16, 3
      %p204 = pnand %p202, %p203
      %p205 = pneg %p204
      // Predicated region
      $region9: #{policy_net_forward.1} parent=5 // pred_check
        _
      $region10: #{policy_net_forward.1} parent=5 // pred_check_branch
        %207 = sbr.rel (%p204) target = $region12
      $region11: #{policy_net_forward.1} parent=5 // pred_region
        %s208 = ssub.s32 %s16, 1
        // Predicated region
        $region13: #{policy_net_forward.1} parent=11 // pred_check
          %p209 = pneg %p63
        $region14: #{policy_net_forward.1} parent=11 // pred_check_branch
          %211 = sbr.rel (%p209) target = $region16
        $region15: #{policy_net_forward.1} parent=11 // pred_region
          _
        $region16: #{policy_net_forward.1} parent=11 // pred_fallthru
          _
        // Predicated region
        $region17: #{policy_net_forward.1} parent=11 // pred_check
          %p212 = pneg %p84
        $region18: #{policy_net_forward.1} parent=11 // pred_check_branch
          %214 = sbr.rel (%p212) target = $region20
        $region19: #{policy_net_forward.1} parent=11 // pred_region
          _
        $region20: #{policy_net_forward.1} parent=11 // pred_fallthru
          _
        // Predicated region
        $region21: #{policy_net_forward.1} parent=11 // pred_check
          %p215 = pneg %p105
        $region22: #{policy_net_forward.1} parent=11 // pred_check_branch
          %217 = sbr.rel (%p215) target = $region24
        $region23: #{policy_net_forward.1} parent=11 // pred_region
          _
        $region24: #{policy_net_forward.1} parent=11 // pred_fallthru
          _
        // Predicated region
        $region25: #{policy_net_forward.1} parent=11 // pred_check
          %p218 = pneg %p126
        $region26: #{policy_net_forward.1} parent=11 // pred_check_branch
          %220 = sbr.rel (%p218) target = $region28
        $region27: #{policy_net_forward.1} parent=11 // pred_region
          _
        $region28: #{policy_net_forward.1} parent=11 // pred_fallthru
          _
        // Predicated region
        $region29: #{policy_net_forward.1} parent=11 // pred_check
          %p221 = pneg %p147
        $region30: #{policy_net_forward.1} parent=11 // pred_check_branch
          %223 = sbr.rel (%p221) target = $region32
        $region31: #{policy_net_forward.1} parent=11 // pred_region
          _
        $region32: #{policy_net_forward.1} parent=11 // pred_fallthru
          _
        // Predicated region
        $region33: #{policy_net_forward.1} parent=11 // pred_check
          %p224 = pneg %p168
        $region34: #{policy_net_forward.1} parent=11 // pred_check_branch
          %226 = sbr.rel (%p224) target = $region36
        $region35: #{policy_net_forward.1} parent=11 // pred_region
          _
        $region36: #{policy_net_forward.1} parent=11 // pred_fallthru
          _
      $region12: #{policy_net_forward.1} parent=5 // pred_fallthru
        _
      %p227 = scmp.lt.s32.totalorder %s16, 2
      // Predicated region
      $region37: #{policy_net_forward.1} parent=5 // pred_check
        %p228 = pneg %p227
      $region38: #{policy_net_forward.1} parent=5 // pred_check_branch
        %230 = sbr.rel (%p228) target = $region40
      $region39: #{policy_net_forward.1} parent=5 // pred_region
        // Predicated region
        $region41: #{policy_net_forward.1} parent=39 // pred_check
          %p231 = pneg %p36
        $region42: #{policy_net_forward.1} parent=39 // pred_check_branch
          %233 = sbr.rel (%p231) target = $region44
        $region43: #{policy_net_forward.1} parent=39 // pred_region
          %s234 = smul.u32 32, %s16
          %p235 = scmp.lt.s32.totalorder %s234, 63
          %s236 = scalar_select %p235, %s234, 63
          %s237 = smul.addr %s236, 8
          %s238 = scalar_lea.vmem %s0, %s237
          %s239 = smul.u32 32, %s16
        $region44: #{policy_net_forward.1} parent=39 // pred_fallthru
          _
      $region40: #{policy_net_forward.1} parent=5 // pred_fallthru
        _
      %p240 = scmp.le.s32.totalorder 1, %s16
      %p241 = scmp.lt.s32.totalorder %s16, 3
      %p242 = pnand %p240, %p241
      %p243 = pneg %p242
      // Predicated region
      $region45: #{policy_net_forward.1} parent=5 // pred_check
        _
      $region46: #{policy_net_forward.1} parent=5 // pred_check_branch
        %245 = sbr.rel (%p242) target = $region48
      $region47: #{policy_net_forward.1} parent=5 // pred_region
        %s246 = ssub.s32 %s16, 1
        %s247 = smul.u32 32, %s21
        %p248 = scmp.lt.s32.totalorder %s247, 63
        %s249 = scalar_select %p248, %s247, 63
        %s250 = smul.addr %s249, 8
        %s251 = scalar_lea.vmem %s0, %s250
        %p252 = pneg %p42
        %p253 = pneg %p39
        %p254 = pneg %p63
        %p255 = pneg %p60
        %p256 = pneg %p84
        %p257 = pneg %p81
        %p258 = pneg %p105
        %p259 = pneg %p102
        %p260 = pneg %p126
        %p261 = pneg %p123
        %p262 = pneg %p147
        %p263 = pneg %p144
        %p264 = pneg %p168
        %p265 = pneg %p165
        %p266 = pneg %p194
        %p267 = pneg %p191
        %s268 = sand.u32 %s181, 1
        %s269 = scalar_lea.sflag [#allocation3], %s268
        %s270 = sand.u32 %s181, 1
        %s271 = smul.addr %s270, 8
        %s272 = scalar_lea.vmem [#allocation2], %s271
        %s273 = smul.u32 32, %s21
        %p274 = scmp.lt.s32.totalorder %s273, 63
        %s275 = scalar_select %p274, %s273, 63
        %s276 = smul.addr %s275, 8
        %s277 = scalar_lea.vmem %s0, %s276
        %s278 = smul.u32 32, %s21
        %s279 = smul.u32 2, %s21
        %v280 = vld [vmem:[%s1] sm:$0xff]
        %v281 = vld [vmem:[%s1 + $0x8] sm:$0xff]
        %v282 = vld [vmem:[%s1 + $0x10] sm:$0xff]
        %v283 = vld [vmem:[%s1 + $0x18] sm:$0xff]
        %v284 = vld [vmem:[%s277] sm:$0xff]
        %v285 = vld [vmem:[%s277 + $0x8] sm:$0xff]
        %v286 = vld [vmem:[%s277 + $0x10] sm:$0xff]
        %v287 = vld [vmem:[%s277 + $0x18] sm:$0xff]
        %v288 = vld [vmem:[%s277 + $0x20] sm:$0xff]
        %v289 = vld [vmem:[%s277 + $0x28] sm:$0xff]
        %v290 = vld [vmem:[%s277 + $0x30] sm:$0xff]
        %v291 = vld [vmem:[%s277 + $0x38] sm:$0xff]
        %v292 = vld [vmem:[%s277 + $0x40] sm:$0xff]
        %v293 = vld [vmem:[%s277 + $0x48] sm:$0xff]
        %v294 = vld [vmem:[%s277 + $0x50] sm:$0xff]
        %v295 = vld [vmem:[%s277 + $0x58] sm:$0xff]
        %v296 = vld [vmem:[%s277 + $0x60] sm:$0xff]
        %v297 = vld [vmem:[%s277 + $0x68] sm:$0xff]
        %v298 = vld [vmem:[%s277 + $0x70] sm:$0xff]
        %v299 = vld [vmem:[%s277 + $0x78] sm:$0xff]
        %v300 = vld [vmem:[%s277 + $0x80] sm:$0xff]
        %v301 = vld [vmem:[%s277 + $0x88] sm:$0xff]
        %v302 = vld [vmem:[%s277 + $0x90] sm:$0xff]
        %v303 = vld [vmem:[%s277 + $0x98] sm:$0xff]
        %v304 = vld [vmem:[%s277 + $0xa0] sm:$0xff]
        %v305 = vld [vmem:[%s277 + $0xa8] sm:$0xff]
        %v306 = vld [vmem:[%s277 + $0xb0] sm:$0xff]
        %v307 = vld [vmem:[%s277 + $0xb8] sm:$0xff]
        %v308 = vld [vmem:[%s277 + $0xc0] sm:$0xff]
        %v309 = vld [vmem:[%s277 + $0xc8] sm:$0xff]
        %v310 = vld [vmem:[%s277 + $0xd0] sm:$0xff]
        %v311 = vld [vmem:[%s277 + $0xd8] sm:$0xff]
        %v312 = vld [vmem:[%s277 + $0xe0] sm:$0xff]
        %v313 = vld [vmem:[%s277 + $0xe8] sm:$0xff]
        %v314 = vld [vmem:[%s277 + $0xf0] sm:$0xff]
        %v315 = vld [vmem:[%s277 + $0xf8] sm:$0xff]
        %v316 = vld [vmem:[%s2] sm:$0xff]
        %v317 = vld [vmem:[%s2 + $0x8] sm:$0xff]
        %v318 = vld [vmem:[%s2 + $0x10] sm:$0xff]
        %v319 = vld [vmem:[%s2 + $0x18] sm:$0xff]
        %321 = vset.pattern.permute.xlu0 0
        %322 = vperm.xlu0 %321, %v316
        %v323 = vpop.permute.xlu0 %322
        %326 = vset.pattern.permute.xlu0 0
        %327 = vperm.xlu0 %326, %v317
        %v328 = vpop.permute.xlu0 %327
        %331 = vset.pattern.permute.xlu0 0
        %332 = vperm.xlu0 %331, %v318
        %v333 = vpop.permute.xlu0 %332
        %336 = vset.pattern.permute.xlu0 0
        %337 = vperm.xlu0 %336, %v319
        %v338 = vpop.permute.xlu0 %337
        %vm340 = vcmask 64512
        %v342 = vsel %vm340, %v280, 0
        %v345 = vsel %vm340, %v281, 0
        %v348 = vsel %vm340, %v282, 0
        %v351 = vsel %vm340, %v283, 0
        %v354 = vsel %vm340, %v284, 0
        %v357 = vsel %vm340, %v285, 0
        %v360 = vsel %vm340, %v286, 0
        %v363 = vsel %vm340, %v287, 0
        %v366 = vsel %vm340, %v288, 0
        %v369 = vsel %vm340, %v289, 0
        %v372 = vsel %vm340, %v290, 0
        %v375 = vsel %vm340, %v291, 0
        %v378 = vsel %vm340, %v292, 0
        %v381 = vsel %vm340, %v293, 0
        %v384 = vsel %vm340, %v294, 0
        %v387 = vsel %vm340, %v295, 0
        %v390 = vsel %vm340, %v296, 0
        %v393 = vsel %vm340, %v297, 0
        %v396 = vsel %vm340, %v298, 0
        %v399 = vsel %vm340, %v299, 0
        %v402 = vsel %vm340, %v300, 0
        %v405 = vsel %vm340, %v301, 0
        %v408 = vsel %vm340, %v302, 0
        %v411 = vsel %vm340, %v303, 0
        %v414 = vsel %vm340, %v304, 0
        %v417 = vsel %vm340, %v305, 0
        %v420 = vsel %vm340, %v306, 0
        %v423 = vsel %vm340, %v307, 0
        %v426 = vsel %vm340, %v308, 0
        %v429 = vsel %vm340, %v309, 0
        %v432 = vsel %vm340, %v310, 0
        %v435 = vsel %vm340, %v311, 0
        %v438 = vsel %vm340, %v312, 0
        %v441 = vsel %vm340, %v313, 0
        %v444 = vsel %vm340, %v314, 0
        %v447 = vsel %vm340, %v315, 0
        %449 = vmatprep.subr.mxu0 0.0
        %450 = vmatpush1.xpose.msra.mxu0 %v354
        %451 = vmatprep.subr.mxu0 0.0
        %452 = vmatpush1.xpose.msra.mxu0 %v357
        %453 = vmatprep.subr.mxu0 0.0
        %454 = vmatpush1.xpose.msra.mxu0 %v360
        %455 = vmatprep.subr.mxu0 0.0
        %456 = vmatpush1.xpose.msra.mxu0 %v363
        %457 = vmatprep.subr.mxu0 0.0
        %458 = vmatpush1.xpose.msra.mxu0 %v366
        %459 = vmatprep.subr.mxu0 0.0
        %460 = vmatpush1.xpose.msra.mxu0 %v369
        %461 = vmatprep.subr.mxu0 0.0
        %462 = vmatpush1.xpose.msra.mxu0 %v372
        %463 = vmatprep.subr.mxu0 0.0
        %464 = vmatpush1.xpose.msra.mxu0 %v375
        %465 = vmatprep.subr.mxu0 0.0
        %466 = vmatpush1.xpose.msra.mxu0 %v378
        %467 = vmatprep.subr.mxu0 0.0
        %468 = vmatpush1.xpose.msra.mxu0 %v381
        %469 = vmatprep.subr.mxu0 0.0
        %470 = vmatpush1.xpose.msra.mxu0 %v384
        %471 = vmatprep.subr.mxu0 0.0
        %472 = vmatpush1.xpose.msra.mxu0 %v387
        %473 = vmatprep.subr.mxu0 0.0
        %474 = vmatpush1.xpose.msra.mxu0 %v390
        %475 = vmatprep.subr.mxu0 0.0
        %476 = vmatpush1.xpose.msra.mxu0 %v393
        %477 = vmatprep.subr.mxu0 0.0
        %478 = vmatpush1.xpose.msra.mxu0 %v396
        %479 = vmatprep.subr.mxu0 0.0
        %480 = vmatpush1.xpose.msra.mxu0 %v399
        %481 = vmatprep.subr.mxu0 0.0
        %482 = vmatpush1.xpose.msra.mxu0 %v402
        %483 = vmatprep.subr.mxu0 0.0
        %484 = vmatpush1.xpose.msra.mxu0 %v405
        %485 = vmatprep.subr.mxu0 0.0
        %486 = vmatpush1.xpose.msra.mxu0 %v408
        %487 = vmatprep.subr.mxu0 0.0
        %488 = vmatpush1.xpose.msra.mxu0 %v411
        %489 = vmatprep.subr.mxu0 0.0
        %490 = vmatpush1.xpose.msra.mxu0 %v414
        %491 = vmatprep.subr.mxu0 0.0
        %492 = vmatpush1.xpose.msra.mxu0 %v417
        %493 = vmatprep.subr.mxu0 0.0
        %494 = vmatpush1.xpose.msra.mxu0 %v420
        %495 = vmatprep.subr.mxu0 0.0
        %496 = vmatpush1.xpose.msra.mxu0 %v423
        %497 = vmatprep.subr.mxu0 0.0
        %498 = vmatpush1.xpose.msra.mxu0 %v426
        %499 = vmatprep.subr.mxu0 0.0
        %500 = vmatpush1.xpose.msra.mxu0 %v429
        %501 = vmatprep.subr.mxu0 0.0
        %502 = vmatpush1.xpose.msra.mxu0 %v432
        %503 = vmatprep.subr.mxu0 0.0
        %504 = vmatpush1.xpose.msra.mxu0 %v435
        %505 = vmatprep.subr.mxu0 0.0
        %506 = vmatpush1.xpose.msra.mxu0 %v438
        %507 = vmatprep.subr.mxu0 0.0
        %508 = vmatpush1.xpose.msra.mxu0 %v441
        %509 = vmatprep.subr.mxu0 0.0
        %510 = vmatpush1.xpose.msra.mxu0 %v444
        %511 = vmatprep.subr.mxu0 0.0
        %512 = vmatpush1.xpose.msra.mxu0 %v447
        %513 = vmatprep.mubr.f32.mxu0 0.0
        %514 = vmatmul.mubr.f32.gmra.mrb[0].mxu0 %v342
        %v515 = vpop.f32.mrb[0].mxu0
        %v516 = vadd.f32 %v323, %v515
        %v517 = vpop.f32.mrb[0].mxu0
        %v518 = vadd.f32 %v323, %v517
        %519 = vmatprep.mubr.f32.mxu0 0.0
        %520 = vmatmul.mubr.f32.gmra.mrb[0].mxu0 %v345
        %v521 = vpop.f32.mrb[0].mxu0
        %v522 = vadd.f32 %v328, %v521
        %v523 = vpop.f32.mrb[0].mxu0
        %v524 = vadd.f32 %v328, %v523
        %525 = vmatprep.mubr.f32.mxu0 0.0
        %526 = vmatmul.mubr.f32.gmra.mrb[0].mxu0 %v348
        %v527 = vpop.f32.mrb[0].mxu0
        %v528 = vadd.f32 %v333, %v527
        %v529 = vpop.f32.mrb[0].mxu0
        %v530 = vadd.f32 %v333, %v529
        %531 = vmatprep.mubr.f32.mxu0 0.0
        %532 = vmatmul.mubr.f32.gmra.mrb[0].mxu0 %v351
        %v533 = vpop.f32.mrb[0].mxu0
        %v534 = vadd.f32 %v338, %v533
        %v535 = vpop.f32.mrb[0].mxu0
        %v536 = vadd.f32 %v338, %v535
        %537 = vdwg.mxu0
        %v538 = vmax.f32 %v516, 0.0
        %v539 = vmax.f32 %v518, 0.0
        %v540 = vmax.f32 %v522, 0.0
        %v541 = vmax.f32 %v524, 0.0
        %v542 = vmax.f32 %v528, 0.0
        %v543 = vmax.f32 %v530, 0.0
        %v544 = vmax.f32 %v534, 0.0
        %v545 = vmax.f32 %v536, 0.0
        %v546 = vld [vmem:[%s3] sm:$0xff]
        %v547 = vld [vmem:[%s3 + $0x8] sm:$0xff]
        %v548 = vld [vmem:[%s3 + $0x10] sm:$0xff]
        %v549 = vld [vmem:[%s3 + $0x18] sm:$0xff]
        %v550 = vld [vmem:[%s3 + $0x20] sm:$0xff]
        %v551 = vld [vmem:[%s3 + $0x28] sm:$0xff]
        %v552 = vld [vmem:[%s3 + $0x30] sm:$0xff]
        %v553 = vld [vmem:[%s3 + $0x38] sm:$0xff]
        %v554 = vld [vmem:[%s4] sm:$0xff]
        %v555 = vld [vmem:[%s4 + $0x8] sm:$0xff]
        %v556 = vld [vmem:[%s4 + $0x10] sm:$0xff]
        %v557 = vld [vmem:[%s4 + $0x18] sm:$0xff]
        %v558 = vld [vmem:[%s4 + $0x20] sm:$0xff]
        %v559 = vld [vmem:[%s4 + $0x28] sm:$0xff]
        %v560 = vld [vmem:[%s4 + $0x30] sm:$0xff]
        %v561 = vld [vmem:[%s4 + $0x38] sm:$0xff]
        %563 = vset.pattern.permute.xlu0 0
        %564 = vperm.xlu0 %563, %v554
        %v565 = vpop.permute.xlu0 %564
        %568 = vset.pattern.permute.xlu0 0
        %569 = vperm.xlu0 %568, %v555
        %v570 = vpop.permute.xlu0 %569
        %573 = vset.pattern.permute.xlu0 0
        %574 = vperm.xlu0 %573, %v556
        %v575 = vpop.permute.xlu0 %574
        %578 = vset.pattern.permute.xlu0 0
        %579 = vperm.xlu0 %578, %v557
        %v580 = vpop.permute.xlu0 %579
        %583 = vset.pattern.permute.xlu0 0
        %584 = vperm.xlu0 %583, %v558
        %v585 = vpop.permute.xlu0 %584
        %588 = vset.pattern.permute.xlu0 0
        %589 = vperm.xlu0 %588, %v559
        %v590 = vpop.permute.xlu0 %589
        %593 = vset.pattern.permute.xlu0 0
        %594 = vperm.xlu0 %593, %v560
        %v595 = vpop.permute.xlu0 %594
        %598 = vset.pattern.permute.xlu0 0
        %599 = vperm.xlu0 %598, %v561
        %v600 = vpop.permute.xlu0 %599
        %vm602 = vcmask 261120
        %v604 = vsel %vm602, %v546, 0
        %v607 = vsel %vm602, %v547, 0
        %v610 = vsel %vm602, %v548, 0
        %v613 = vsel %vm602, %v549, 0
        %v616 = vsel %vm602, %v550, 0
        %v619 = vsel %vm602, %v551, 0
        %v622 = vsel %vm602, %v552, 0
        %v625 = vsel %vm602, %v553, 0
        %627 = vmatprep.subr.mxu0 %v539
        %628 = vmatpush1.msra.mxu0 %v538
        %629 = vmatprep.subr.mxu0 %v541
        %630 = vmatpush1.msra.mxu0 %v540
        %631 = vmatprep.subr.mxu0 %v543
        %632 = vmatpush1.msra.mxu0 %v542
        %633 = vmatprep.subr.mxu0 %v545
        %634 = vmatpush1.msra.mxu0 %v544
        %635 = vmatprep.subr.mxu0 0.0
        %636 = vmatpush1.msra.mxu0 0.0
        %637 = vmatprep.subr.mxu0 0.0
        %638 = vmatpush1.msra.mxu0 0.0
        %639 = vmatprep.subr.mxu0 0.0
        %640 = vmatpush1.msra.mxu0 0.0
        %641 = vmatprep.subr.mxu0 0.0
        %642 = vmatpush1.msra.mxu0 0.0
        %643 = vmatprep.subr.mxu0 0.0
        %644 = vmatpush1.msra.mxu0 0.0
        %645 = vmatprep.subr.mxu0 0.0
        %646 = vmatpush1.msra.mxu0 0.0
        %647 = vmatprep.subr.mxu0 0.0
        %648 = vmatpush1.msra.mxu0 0.0
        %649 = vmatprep.subr.mxu0 0.0
        %650 = vmatpush1.msra.mxu0 0.0
        %651 = vmatprep.subr.mxu0 0.0
        %652 = vmatpush1.msra.mxu0 0.0
        %653 = vmatprep.subr.mxu0 0.0
        %654 = vmatpush1.msra.mxu0 0.0
        %655 = vmatprep.subr.mxu0 0.0
        %656 = vmatpush1.msra.mxu0 0.0
        %657 = vmatprep.subr.mxu0 0.0
        %658 = vmatpush1.msra.mxu0 0.0
        %659 = vmatprep.subr.mxu0 0.0
        %660 = vmatpush1.msra.mxu0 0.0
        %661 = vmatprep.subr.mxu0 0.0
        %662 = vmatpush1.msra.mxu0 0.0
        %663 = vmatprep.subr.mxu0 0.0
        %664 = vmatpush1.msra.mxu0 0.0
        %665 = vmatprep.subr.mxu0 0.0
        %666 = vmatpush1.msra.mxu0 0.0
        %667 = vmatprep.subr.mxu0 0.0
        %668 = vmatpush1.msra.mxu0 0.0
        %669 = vmatprep.subr.mxu0 0.0
        %670 = vmatpush1.msra.mxu0 0.0
        %671 = vmatprep.subr.mxu0 0.0
        %672 = vmatpush1.msra.mxu0 0.0
        %673 = vmatprep.subr.mxu0 0.0
        %674 = vmatpush1.msra.mxu0 0.0
        %675 = vmatprep.subr.mxu0 0.0
        %676 = vmatpush1.msra.mxu0 0.0
        %677 = vmatprep.subr.mxu0 0.0
        %678 = vmatpush1.msra.mxu0 0.0
        %679 = vmatprep.subr.mxu0 0.0
        %680 = vmatpush1.msra.mxu0 0.0
        %681 = vmatprep.subr.mxu0 0.0
        %682 = vmatpush1.msra.mxu0 0.0
        %683 = vmatprep.subr.mxu0 0.0
        %684 = vmatpush1.msra.mxu0 0.0
        %685 = vmatprep.subr.mxu0 0.0
        %686 = vmatpush1.msra.mxu0 0.0
        %687 = vmatprep.subr.mxu0 0.0
        %688 = vmatpush1.msra.mxu0 0.0
        %689 = vmatprep.subr.mxu0 0.0
        %690 = vmatpush1.msra.mxu0 0.0
        %691 = vmatprep.mubr.f32.mxu0 0.0
        %692 = vmatmul.mubr.f32.gmra.mrb[0].mxu0 %v604
        %v693 = vpop.f32.mrb[0].mxu0
        %v694 = vadd.f32 %v565, %v693
        %v695 = vpop.f32.mrb[0].mxu0
        %v696 = vadd.f32 %v565, %v695
        %697 = vmatprep.mubr.f32.mxu0 0.0
        %698 = vmatmul.mubr.f32.gmra.mrb[0].mxu0 %v607
        %v699 = vpop.f32.mrb[0].mxu0
        %v700 = vadd.f32 %v570, %v699
        %v701 = vpop.f32.mrb[0].mxu0
        %v702 = vadd.f32 %v570, %v701
        %703 = vmatprep.mubr.f32.mxu0 0.0
        %704 = vmatmul.mubr.f32.gmra.mrb[0].mxu0 %v610
        %v705 = vpop.f32.mrb[0].mxu0
        %v706 = vadd.f32 %v575, %v705
        %v707 = vpop.f32.mrb[0].mxu0
        %v708 = vadd.f32 %v575, %v707
        %709 = vmatprep.mubr.f32.mxu0 0.0
        %710 = vmatmul.mubr.f32.gmra.mrb[0].mxu0 %v613
        %v711 = vpop.f32.mrb[0].mxu0
        %v712 = vadd.f32 %v580, %v711
        %v713 = vpop.f32.mrb[0].mxu0
        %v714 = vadd.f32 %v580, %v713
        %715 = vmatprep.mubr.f32.mxu0 0.0
        %716 = vmatmul.mubr.f32.gmra.mrb[0].mxu0 %v616
        %v717 = vpop.f32.mrb[0].mxu0
        %v718 = vadd.f32 %v585, %v717
        %v719 = vpop.f32.mrb[0].mxu0
        %v720 = vadd.f32 %v585, %v719
        %721 = vmatprep.mubr.f32.mxu0 0.0
        %722 = vmatmul.mubr.f32.gmra.mrb[0].mxu0 %v619
        %v723 = vpop.f32.mrb[0].mxu0
        %v724 = vadd.f32 %v590, %v723
        %v725 = vpop.f32.mrb[0].mxu0
        %v726 = vadd.f32 %v590, %v725
        %727 = vmatprep.mubr.f32.mxu0 0.0
        %728 = vmatmul.mubr.f32.gmra.mrb[0].mxu0 %v622
        %v729 = vpop.f32.mrb[0].mxu0
        %v730 = vadd.f32 %v595, %v729
        %v731 = vpop.f32.mrb[0].mxu0
        %v732 = vadd.f32 %v595, %v731
        %733 = vmatprep.mubr.f32.mxu0 0.0
        %734 = vmatmul.mubr.f32.gmra.mrb[0].mxu0 %v625
        %v735 = vpop.f32.mrb[0].mxu0
        %v736 = vadd.f32 %v600, %v735
        %v737 = vpop.f32.mrb[0].mxu0
        %v738 = vadd.f32 %v600, %v737
        %739 = vdwg.mxu0
        %v740 = vmax.f32 %v694, 0.0
        %v741 = vmax.f32 %v696, 0.0
        %v742 = vmax.f32 %v700, 0.0
        %v743 = vmax.f32 %v702, 0.0
        %v744 = vmax.f32 %v706, 0.0
        %v745 = vmax.f32 %v708, 0.0
        %v746 = vmax.f32 %v712, 0.0
        %v747 = vmax.f32 %v714, 0.0
        %v748 = vmax.f32 %v718, 0.0
        %v749 = vmax.f32 %v720, 0.0
        %v750 = vmax.f32 %v724, 0.0
        %v751 = vmax.f32 %v726, 0.0
        %v752 = vmax.f32 %v730, 0.0
        %v753 = vmax.f32 %v732, 0.0
        %v754 = vmax.f32 %v736, 0.0
        %v755 = vmax.f32 %v738, 0.0
        %v756 = vld [vmem:[%s5] sm:$0xf]
        %v757 = vld [vmem:[%s6] sm:$0xf]
        %759 = vset.pattern.permute.xlu0 0
        %760 = vperm.xlu0 %759, %v757
        %v761 = vpop.permute.xlu0 %760
        %vm763 = vcmask 523264
        %v765 = vsel %vm763, %v756, 0
        %767 = vmatprep.subr.mxu0 %v741
        %768 = vmatpush1.msra.mxu0 %v740
        %769 = vmatprep.subr.mxu0 %v743
        %770 = vmatpush1.msra.mxu0 %v742
        %771 = vmatprep.subr.mxu0 %v745
        %772 = vmatpush1.msra.mxu0 %v744
        %773 = vmatprep.subr.mxu0 %v747
        %774 = vmatpush1.msra.mxu0 %v746
        %775 = vmatprep.subr.mxu0 %v749
        %776 = vmatpush1.msra.mxu0 %v748
        %777 = vmatprep.subr.mxu0 %v751
        %778 = vmatpush1.msra.mxu0 %v750
        %779 = vmatprep.subr.mxu0 %v753
        %780 = vmatpush1.msra.mxu0 %v752
        %781 = vmatprep.subr.mxu0 %v755
        %782 = vmatpush1.msra.mxu0 %v754
        %783 = vmatprep.subr.mxu0 0.0
        %784 = vmatpush1.msra.mxu0 0.0
        %785 = vmatprep.subr.mxu0 0.0
        %786 = vmatpush1.msra.mxu0 0.0
        %787 = vmatprep.subr.mxu0 0.0
        %788 = vmatpush1.msra.mxu0 0.0
        %789 = vmatprep.subr.mxu0 0.0
        %790 = vmatpush1.msra.mxu0 0.0
        %791 = vmatprep.subr.mxu0 0.0
        %792 = vmatpush1.msra.mxu0 0.0
        %793 = vmatprep.subr.mxu0 0.0
        %794 = vmatpush1.msra.mxu0 0.0
        %795 = vmatprep.subr.mxu0 0.0
        %796 = vmatpush1.msra.mxu0 0.0
        %797 = vmatprep.subr.mxu0 0.0
        %798 = vmatpush1.msra.mxu0 0.0
        %799 = vmatprep.subr.mxu0 0.0
        %800 = vmatpush1.msra.mxu0 0.0
        %801 = vmatprep.subr.mxu0 0.0
        %802 = vmatpush1.msra.mxu0 0.0
        %803 = vmatprep.subr.mxu0 0.0
        %804 = vmatpush1.msra.mxu0 0.0
        %805 = vmatprep.subr.mxu0 0.0
        %806 = vmatpush1.msra.mxu0 0.0
        %807 = vmatprep.subr.mxu0 0.0
        %808 = vmatpush1.msra.mxu0 0.0
        %809 = vmatprep.subr.mxu0 0.0
        %810 = vmatpush1.msra.mxu0 0.0
        %811 = vmatprep.subr.mxu0 0.0
        %812 = vmatpush1.msra.mxu0 0.0
        %813 = vmatprep.subr.mxu0 0.0
        %814 = vmatpush1.msra.mxu0 0.0
        %815 = vmatprep.subr.mxu0 0.0
        %816 = vmatpush1.msra.mxu0 0.0
        %817 = vmatprep.subr.mxu0 0.0
        %818 = vmatpush1.msra.mxu0 0.0
        %819 = vmatprep.subr.mxu0 0.0
        %820 = vmatpush1.msra.mxu0 0.0
        %821 = vmatprep.subr.mxu0 0.0
        %822 = vmatpush1.msra.mxu0 0.0
        %823 = vmatprep.subr.mxu0 0.0
        %824 = vmatpush1.msra.mxu0 0.0
        %825 = vmatprep.subr.mxu0 0.0
        %826 = vmatpush1.msra.mxu0 0.0
        %827 = vmatprep.subr.mxu0 0.0
        %828 = vmatpush1.msra.mxu0 0.0
        %829 = vmatprep.subr.mxu0 0.0
        %830 = vmatpush1.msra.mxu0 0.0
        %831 = vmatprep.mubr.f32.mxu0 0.0
        %832 = vmatmul.mubr.f32.gmra.mrb[0].mxu0 %v765
        %v833 = vpop.f32.mrb[0].mxu0
        %v834 = vadd.f32 %v761, %v833
        %v835 = vpop.f32.mrb[0].mxu0
        %v836 = vadd.f32 %v761, %v835
        %837 = vdwg.mxu0
        %vm838 = vcmask 1043456
        %v839 = vsel %vm838, %v834, -inf
        %v840 = vrot.slane %v839, 4
        %v841 = vmax.f32 %v839, %v840
        %v842 = vrot.slane %v841, 2
        %v843 = vmax.f32 %v841, %v842
        %v844 = vrot.slane %v843, 1
        %v845 = vmax.f32 %v843, %v844
        %v846 = vsel %vm838, %v836, -inf
        %v847 = vrot.slane %v846, 4
        %v848 = vmax.f32 %v846, %v847
        %v849 = vrot.slane %v848, 2
        %v850 = vmax.f32 %v848, %v849
        %v851 = vrot.slane %v850, 1
        %v852 = vmax.f32 %v850, %v851
        %v853 = vsub.f32 %v834, %v845
        %v854 = vsub.f32 %v836, %v852
        %v855 = vmul.f32 %v853, 1.442695
        %v856 = vpow.pop %v855
        %v857 = vmul.f32 %v854, 1.442695
        %v858 = vpow.pop %v857
        %v859 = vsel %vm838, %v856, 0.0
        %v860 = vrot.slane %v859, 4
        %v861 = vadd.f32 %v859, %v860
        %v862 = vrot.slane %v861, 2
        %v863 = vadd.f32 %v861, %v862
        %v864 = vrot.slane %v863, 1
        %v865 = vadd.f32 %v863, %v864
        %v866 = vsel %vm838, %v858, 0.0
        %v867 = vrot.slane %v866, 4
        %v868 = vadd.f32 %v866, %v867
        %v869 = vrot.slane %v868, 2
        %v870 = vadd.f32 %v868, %v869
        %v871 = vrot.slane %v870, 1
        %v872 = vadd.f32 %v870, %v871
        %v873 = vrcp.pop %v865
        %v874 = vmul.f32 %v856, %v873
        %v875 = vrcp.pop %v872
        %v876 = vmul.f32 %v858, %v875
        %v879 = vcombine.low %v874, %v876
        %881 = vst [vmem:[%s272] sm:$0xff] %v879
        %s882 = sand.u32 %s181, 1
        %s883 = scalar_lea.sflag [#allocation3], %s882
        %s884 = sand.u32 %s181, 1
        %s885 = smul.addr %s884, 8
        %s886 = scalar_lea.vmem [#allocation2], %s885
        // Predicated region
        $region49: #{policy_net_forward.1} parent=47 // pred_check
          %p887 = pneg %p191
        $region50: #{policy_net_forward.1} parent=47 // pred_check_branch
          %889 = sbr.rel (%p887) target = $region52
        $region51: #{policy_net_forward.1} parent=47 // pred_region
          %s890 = smul.u32 2, %s21
          %s892 = ssub.s32 128, 128
          %893 = vsyncadd %s883, %s892
          %s894 = smul.addr %s890, 64
          %s895 = scalar_lea.hbm %s7, %s894
          %s897 = sshll.u32 %s886, 4
          %s898 = int_to_ptr.vmem [resolvable:$true] %s897
          %900 = dma.vmem_to_hbm [thread:$0]  %s898, 128, %s895, %s883
        $region52: #{policy_net_forward.1} parent=47 // pred_fallthru
          _
      $region48: #{policy_net_forward.1} parent=5 // pred_fallthru
        _
      %p901 = scmp.le.s32.totalorder 2, %s16
      // Predicated region
      $region53: #{policy_net_forward.1} parent=5 // pred_check
        %p902 = pneg %p901
      $region54: #{policy_net_forward.1} parent=5 // pred_check_branch
        %904 = sbr.rel (%p902) target = $region56
      $region55: #{policy_net_forward.1} parent=5 // pred_region
        %s905 = ssub.s32 %s16, 2
        // Predicated region
        $region57: #{policy_net_forward.1} parent=55 // pred_check
          %p906 = pneg %p197
        $region58: #{policy_net_forward.1} parent=55 // pred_check_branch
          %908 = sbr.rel (%p906) target = $region60
        $region59: #{policy_net_forward.1} parent=55 // pred_region
          %s909 = sand.u32 %s182, 1
          %s910 = scalar_lea.sflag [#allocation3], %s909
          %s911 = sand.u32 %s182, 1
          %s912 = smul.addr %s911, 8
          %s913 = scalar_lea.vmem [#allocation2], %s912
          %914 = dma.done %s910, 128
        $region60: #{policy_net_forward.1} parent=55 // pred_fallthru
          _
      $region56: #{policy_net_forward.1} parent=5 // pred_fallthru
        _
    $region6: #{policy_net_forward.1} parent=1 // loop_footer
      %s20 = sadd.s32 1, %s16
    $region7: #{policy_net_forward.1} parent=1 // loop_footer_branch
      %15 = sbr.rel target = $region3
    $region8: #{policy_net_forward.1} parent=1 // loop_exit
      _
    %915 = vsyncpa [#allocation3], 1
    %s916 = scalar_lea.sflag [#allocation3], 1
    %917 = vsyncpa %s916, 1

</llo_original>
